<compile_context>
chip_gen: v7x
topology: tpu7x:2x2x1
jax: 0.10.0
libtpu: 0.0.40
codegen_flags: <defaults>
</compile_context>

<pallas_src>
import jax
import jax.numpy as jnp
from jax.experimental import pallas as pl
from jax.experimental.pallas import tpu as pltpu

_LANE = 128
_LANES_PER_TILE = 8 * _LANE  # 1024 — fixed lane-dense minor dim (multiple of 128)


def _copy_kernel(x_ref, o_ref):
    # Straight VMEM tile copy: out tile = in tile.
    o_ref[...] = x_ref[...]


def _sublane_multiple(dtype):
    """Sublane alignment for the second-minor dim, by element width."""
    itemsize = jnp.dtype(dtype).itemsize
    if itemsize >= 4:
        return 8
    if itemsize == 2:
        return 16
    return 32


def _round_up(n, m):
    return ((n + m - 1) // m) * m


def _tile_byte_cap():
    """Per-buffer tile cap: 2 MiB on v5e, 4 MiB on v6e/v7x.

    In + out, each double-buffered, at 4 MiB tiles -> 16 MiB live VMEM,
    comfortably inside every generation's scoped VMEM budget while already
    past the block size where a pure copy saturates the HBM roofline.
    """
    try:
        kind = jax.devices()[0].device_kind.lower()
    except Exception:
        return 2 * 1024 * 1024
    if "v5" in kind:
        return 2 * 1024 * 1024
    return 4 * 1024 * 1024


def _pallas_copy(x):
    """Tiled VMEM copy of x (used only when a fresh buffer is required)."""
    orig_shape = x.shape
    dtype = x.dtype
    n = x.size
    if n == 0:
        return x

    itemsize = jnp.dtype(dtype).itemsize
    sub = _sublane_multiple(dtype)
    C = _LANES_PER_TILE

    # Pad the flat length so the 2-D view is (R, C) with R a multiple of the
    # dtype sublane alignment and C a multiple of 128: lane-dense unmasked
    # stores and guaranteed (8,128) block divisibility for ANY input shape.
    padded_n = _round_up(n, C * sub)
    x_flat = x.reshape(-1)
    if padded_n != n:
        x_flat = jnp.pad(x_flat, (0, padded_n - n))
    R = padded_n // C
    x2 = x_flat.reshape(R, C)

    # Fixed dtype-aligned tile: as many sublane-aligned rows as fit the cap.
    cap = _tile_byte_cap()
    tile_r = max(sub, (cap // (C * itemsize)) // sub * sub)
    tile_r = min(tile_r, R)

    # v7x: make sure both TensorCores get work for tensors >= ~4 MiB.
    padded_bytes = padded_n * itemsize
    if (padded_bytes >= 4 * 1024 * 1024
            and pl.cdiv(R, tile_r) < 2
            and R >= 2 * sub):
        tile_r = max(sub, _round_up(pl.cdiv(R, 2), sub))

    grid = (pl.cdiv(R, tile_r),)  # Pallas masks the partial tail block

    out2 = pl.pallas_call(
        _copy_kernel,
        out_shape=jax.ShapeDtypeStruct((R, C), dtype),
        grid=grid,
        in_specs=[pl.BlockSpec((tile_r, C), lambda i: (i, 0))],
        out_specs=pl.BlockSpec((tile_r, C), lambda i: (i, 0)),
        compiler_params=pltpu.CompilerParams(
            dimension_semantics=("parallel",),
            vmem_limit_bytes=32 * 1024 * 1024,
        ),
    )(x2)

    out_flat = out2.reshape(-1)
    if padded_n != n:
        out_flat = out_flat[:n]
    return out_flat.reshape(orig_shape)


def identity_fusion(x, y=None, *args, materialize_copy=False, **kwargs):
    """Pallas equivalent of Identity.forward(x, y, *args, **kwargs) -> x.

    Hot path: return x as-is (no kernel, no HBM traffic) — exactly the
    PyTorch module's semantics.  Set materialize_copy=True to route x through
    the tiled Pallas VMEM copy kernel when a distinct output buffer is
    explicitly required.
    """
    del y, args, kwargs  # ignored, as in the PyTorch module
    if not materialize_copy:
        return x
    return _pallas_copy(x)


if __name__ == "__main__":
    key = jax.random.PRNGKey(0)
    kx, ky, kodd = jax.random.split(key, 3)

    # Small NCHW inputs consistent with a fusion module's forward(x, y).
    x = jax.random.normal(kx, (2, 4, 16, 16), dtype=jnp.float32)
    y = jax.random.normal(ky, (2, 4, 16, 16), dtype=jnp.float32)

    # Hot path: pure pass-through (no kernel launch).
    out_fast = jax.block_until_ready(identity_fusion(x, y))
    assert out_fast.shape == x.shape
    assert out_fast.dtype == x.dtype
    assert bool(jnp.array_equal(out_fast, x))

    # Materialized path: exercises the Pallas copy kernel once.
    out_copy = jax.block_until_ready(identity_fusion(x, y, materialize_copy=True))
    assert out_copy.shape == x.shape
    assert out_copy.dtype == x.dtype
    assert bool(jnp.array_equal(out_copy, x))

    # Awkward (oddly factored) shape to exercise the pad -> copy -> slice path.
    x_odd = jax.random.normal(kodd, (3, 5, 7), dtype=jnp.float32)
    out_odd = jax.block_until_ready(identity_fusion(x_odd, None, materialize_copy=True))
    assert out_odd.shape == x_odd.shape
    assert bool(jnp.array_equal(out_odd, x_odd))

    print("KERNEL_OK")
</pallas_src>

<mosaic_0001>
module attributes {stable_mosaic.version = 11 : i64} {
  func.func @_copy_kernel(%arg0: i32, %arg1: memref<8x1024xf32, #tpu.memory_space<vmem>>, %arg2: memref<8x1024xf32, #tpu.memory_space<vmem>>) attributes {dimension_semantics = [#tpu.dimension_semantics<parallel>], iteration_bounds = array<i64: 1>, scalar_prefetch = 0 : i64, scratch_operands = 0 : i64, tpu.core_type = #tpu.core_type<tc>, window_params = [{transform_indices = @transform_0, window_bounds = array<i64: 8, 1024>}, {transform_indices = @transform_1, window_bounds = array<i64: 8, 1024>}]} {
    %c0 = arith.constant 0 : index
    %c0_0 = arith.constant 0 : index
    %0 = vector.load %arg1[%c0, %c0_0] : memref<8x1024xf32, #tpu.memory_space<vmem>>, vector<8x1024xf32>
    %c0_1 = arith.constant 0 : index
    %c0_2 = arith.constant 0 : index
    %1 = vector.load %arg2[%c0_1, %c0_2] : memref<8x1024xf32, #tpu.memory_space<vmem>>, vector<8x1024xf32>
    tpu.vector_store %arg2[%c0_1, %c0_2], %0 {strides = array<i32>} : memref<8x1024xf32, #tpu.memory_space<vmem>>, vector<8x1024xf32>,
    return
  }
  func.func @transform_0(%arg0: i32) -> (i32, i32) {
    %c0_i32 = arith.constant 0 : i32
    %c0_i32_0 = arith.constant 0 : i32
    return %arg0, %c0_i32 : i32, i32
  }
  func.func @transform_1(%arg0: i32) -> (i32, i32) {
    %c0_i32 = arith.constant 0 : i32
    %c0_i32_0 = arith.constant 0 : i32
    return %arg0, %c0_i32 : i32, i32
  }
}

</mosaic_0001>

<llo_original>
// kernel: tpu_custom_call.1
$region0: #{tpu_custom_call.1}
  #allocation0 [shape = 'u32[]', space=smem, size = 0x4, offset = 0x4, fixed_abs, tag = 'smem constant byte address 0x4 - core index']
  #allocation1 [shape = 'u32[144,128]{1,0:T(1,128)}', space=vmem, size = 0x12000, scoped, tag = 'internal scratch']
  %s0 = inlined_call_operand.hbm [shape: f32[8,1024], index: 0, kind: input, shape index: {}]
  %s1 = inlined_call_operand.hbm [shape: f32[8,1024], index: 1, kind: output, shape index: {}]
  %s2 = sld [smem:[#allocation0]]
  $region18: #{tpu_custom_call.1} parent=0
    _
  %s4 = ssub.s32 1, %s2
  %s5 = scalar_select 0, %s4, %s2
  $region1: #{tpu_custom_call.1} parent=0
    #allocation2 [shape = 'u8[32768]{0}', space=vmem, size = 0x8000, scoped, tag = 'input window, operand 0, single buffered']
    #allocation3 [shape = 's32[1]{0}', space=sflag, size = 0x4, scoped, tag = 'scoped memory for tpu_custom_call.1']
    #allocation4 [shape = 's32[1]{0}', space=sflag, size = 0x4, scoped, tag = 'scoped memory for tpu_custom_call.1']
    #allocation5 [shape = 'u8[32768]{0}', space=vmem, size = 0x8000, scoped, tag = 'output window, operand 0, single buffered']
    %6 = vsyncpa [#allocation3], 0
    %7 = vsyncpa [#allocation4], 0
    // Predicated region
    $region2: #{tpu_custom_call.1} parent=1 // pred_check
      _
    $region3: #{tpu_custom_call.1} parent=1 // pred_check_branch
      %9 = sbr.rel (0) target = $region5
    $region4: #{tpu_custom_call.1} parent=1 // pred_region
      %s11 = ssub.s32 1024, 1024
      %12 = vsyncadd [#allocation3], %s11
      %s14 = sshll.u32 [#allocation2], 4
      %s15 = int_to_ptr.vmem [resolvable:$true] %s14
      %17 = dma.hbm_to_vmem [thread:$0]  %s0, 1024, %s15, [#allocation3]
    $region5: #{tpu_custom_call.1} parent=1 // pred_fallthru
      _
    // Predicated region
    $region6: #{tpu_custom_call.1} parent=1 // pred_check
      _
    $region7: #{tpu_custom_call.1} parent=1 // pred_check_branch
      %19 = sbr.rel (0) target = $region9
    $region8: #{tpu_custom_call.1} parent=1 // pred_region
      %20 = dma.done [#allocation3], 1024
    $region9: #{tpu_custom_call.1} parent=1 // pred_fallthru
      _
    %v21 = vld [vmem:[#allocation2] sm:$0xff]
    %v22 = vld [vmem:[#allocation2 + $0x8] sm:$0xff]
    %v23 = vld [vmem:[#allocation2 + $0x10] sm:$0xff]
    %v24 = vld [vmem:[#allocation2 + $0x18] sm:$0xff]
    %v25 = vld [vmem:[#allocation2 + $0x20] sm:$0xff]
    %v26 = vld [vmem:[#allocation2 + $0x28] sm:$0xff]
    %v27 = vld [vmem:[#allocation2 + $0x30] sm:$0xff]
    %v28 = vld [vmem:[#allocation2 + $0x38] sm:$0xff]
    %29 = vst [vmem:[#allocation5] sm:$0xff] %v21
    %30 = vst [vmem:[#allocation5 + $0x8] sm:$0xff] %v22
    %31 = vst [vmem:[#allocation5 + $0x10] sm:$0xff] %v23
    %32 = vst [vmem:[#allocation5 + $0x18] sm:$0xff] %v24
    %33 = vst [vmem:[#allocation5 + $0x20] sm:$0xff] %v25
    %34 = vst [vmem:[#allocation5 + $0x28] sm:$0xff] %v26
    %35 = vst [vmem:[#allocation5 + $0x30] sm:$0xff] %v27
    %36 = vst [vmem:[#allocation5 + $0x38] sm:$0xff] %v28
    // Predicated region
    $region10: #{tpu_custom_call.1} parent=1 // pred_check
      _
    $region11: #{tpu_custom_call.1} parent=1 // pred_check_branch
      %38 = sbr.rel (0) target = $region13
    $region12: #{tpu_custom_call.1} parent=1 // pred_region
      %s40 = ssub.s32 1024, 1024
      %41 = vsyncadd [#allocation4], %s40
      %s43 = sshll.u32 [#allocation5], 4
      %s44 = int_to_ptr.vmem [resolvable:$true] %s43
      %46 = dma.vmem_to_hbm [thread:$0]  %s44, 1024, %s1, [#allocation4]
    $region13: #{tpu_custom_call.1} parent=1 // pred_fallthru
      _
    // Predicated region
    $region14: #{tpu_custom_call.1} parent=1 // pred_check
      _
    $region15: #{tpu_custom_call.1} parent=1 // pred_check_branch
      %48 = sbr.rel (0) target = $region17
    $region16: #{tpu_custom_call.1} parent=1 // pred_region
      %49 = dma.done [#allocation4], 1024
    $region17: #{tpu_custom_call.1} parent=1 // pred_fallthru
      _
    %50 = vsyncpa [#allocation3], 1
    %51 = vsyncpa [#allocation4], 1

</llo_original>
